<compile_context>
chip_gen: v7x
topology: tpu7x:2x2x1
jax: 0.10.0
libtpu: 0.0.40
codegen_flags: <defaults>
</compile_context>

<pallas_src>
import jax
import jax.numpy as jnp
from jax.experimental import pallas as pl
from jax.experimental.pallas import tpu as pltpu

HIDDEN_UNITS = 128
LANES = 128
SUBLANES = 8


def _round_up(n, m):
    return ((n + m - 1) // m) * m


def dqn_kernel(x_ref, w1_ref, b1_ref, w2_ref, b2_ref, w3_ref, b3_ref, o_ref):
    x = x_ref[...]                      # (TB, IN_PAD) f32
    w1 = w1_ref[...]                    # (IN_PAD, H)  f32
    tb = x.shape[0]
    h = w1.shape[1]

    # ---- Layer 1 ----
    if x.shape[1] <= 32:
        # K is tiny: a systolic MXU pass would be almost all fill/drain latency,
        # so use IN_PAD VPU broadcast-MACs (statically unrolled) instead.
        h1 = jnp.broadcast_to(b1_ref[...], (tb, h)).astype(jnp.float32)
        for k in range(x.shape[1]):
            h1 = h1 + x[:, k:k + 1] * w1[k:k + 1, :]
    else:
        h1 = jnp.dot(x, w1, preferred_element_type=jnp.float32) + b1_ref[...]
    h1 = jnp.maximum(h1, 0.0)

    # ---- Layer 2: bf16 MXU matmul, f32 accumulate / bias / ReLU ----
    h2 = jnp.dot(h1.astype(jnp.bfloat16), w2_ref[...],
                 preferred_element_type=jnp.float32) + b2_ref[...]
    h2 = jnp.maximum(h2, 0.0)

    # ---- Layer 3: bf16 MXU matmul into a lane-dense (padded) output block ----
    out = jnp.dot(h2.astype(jnp.bfloat16), w3_ref[...],
                  preferred_element_type=jnp.float32) + b3_ref[...]
    o_ref[...] = out.astype(o_ref.dtype)


def dqn_forward(x, params, *, batch_tile=128):
    w1, b1, w2, b2, w3, b3 = params
    B, in_features = x.shape
    H = w1.shape[1]
    out_features = w3.shape[1]

    # ---- lane/sublane-dense padding (pure layout plumbing, no extra math) ----
    in_pad = max(SUBLANES, _round_up(in_features, SUBLANES))
    out_pad = max(LANES, _round_up(out_features, LANES))
    tb = batch_tile if B >= batch_tile else _round_up(B, SUBLANES)
    b_pad = _round_up(B, tb)

    x_p = jnp.zeros((b_pad, in_pad), jnp.float32).at[:B, :in_features].set(
        x.astype(jnp.float32))
    w1_p = jnp.zeros((in_pad, H), jnp.float32).at[:in_features, :].set(
        w1.astype(jnp.float32))
    b1_p = b1.reshape(1, H).astype(jnp.float32)
    w2_b = w2.astype(jnp.bfloat16)
    b2_p = b2.reshape(1, H).astype(jnp.float32)
    w3_p = jnp.zeros((H, out_pad), jnp.bfloat16).at[:, :out_features].set(
        w3.astype(jnp.bfloat16))
    b3_p = jnp.zeros((1, out_pad), jnp.float32).at[:, :out_features].set(
        b3.reshape(1, out_features).astype(jnp.float32))

    grid = (b_pad // tb,)
    flops = 2 * b_pad * (in_pad * H + H * H + H * out_pad)
    bytes_accessed = (x_p.size * 4 + w1_p.size * 4 + b1_p.size * 4
                      + w2_b.size * 2 + b2_p.size * 4 + w3_p.size * 2
                      + b3_p.size * 4 + b_pad * out_pad * 4)

    out_padded = pl.pallas_call(
        dqn_kernel,
        out_shape=jax.ShapeDtypeStruct((b_pad, out_pad), jnp.float32),
        grid=grid,
        in_specs=[
            pl.BlockSpec((tb, in_pad), lambda i: (i, 0)),       # x: tiled over batch
            pl.BlockSpec((in_pad, H), lambda i: (0, 0)),        # w1: VMEM-resident
            pl.BlockSpec((1, H), lambda i: (0, 0)),             # b1
            pl.BlockSpec((H, H), lambda i: (0, 0)),             # w2
            pl.BlockSpec((1, H), lambda i: (0, 0)),             # b2
            pl.BlockSpec((H, out_pad), lambda i: (0, 0)),       # w3
            pl.BlockSpec((1, out_pad), lambda i: (0, 0)),       # b3
        ],
        out_specs=pl.BlockSpec((tb, out_pad), lambda i: (i, 0)),
        compiler_params=pltpu.CompilerParams(
            dimension_semantics=("parallel",)),
        cost_estimate=pl.CostEstimate(
            flops=flops, transcendentals=0, bytes_accessed=bytes_accessed),
    )(x_p, w1_p, b1_p, w2_b, b2_p, w3_p, b3_p)

    return out_padded[:B, :out_features]


def init_linear(key, in_features, out_features):
    # Mimics torch.nn.Linear default init: U(-1/sqrt(fan_in), 1/sqrt(fan_in)).
    k_w, k_b = jax.random.split(key)
    bound = 1.0 / jnp.sqrt(jnp.float32(in_features))
    # Stored (in, out) so the kernel computes x @ W (== torch's x @ W^T).
    w = jax.random.uniform(k_w, (in_features, out_features), jnp.float32, -bound, bound)
    b = jax.random.uniform(k_b, (1, out_features), jnp.float32, -bound, bound)
    return w, b


def init_dqn_params(key, input_features, output_features):
    k1, k2, k3 = jax.random.split(key, 3)
    w1, b1 = init_linear(k1, input_features, HIDDEN_UNITS)
    w2, b2 = init_linear(k2, HIDDEN_UNITS, HIDDEN_UNITS)
    w3, b3 = init_linear(k3, HIDDEN_UNITS, output_features)
    return (w1, b1, w2, b2, w3, b3)


def dqn_reference(x, params):
    # Pure f32 reference of the PyTorch module's forward pass.
    w1, b1, w2, b2, w3, b3 = params
    h1 = jnp.maximum(x @ w1 + b1, 0.0)
    h2 = jnp.maximum(h1 @ w2 + b2, 0.0)
    return h2 @ w3 + b3


if __name__ == "__main__":
    key = jax.random.PRNGKey(0)
    k_params, k_x = jax.random.split(key)

    # DQN-ish shapes (CartPole: 4 observations, 2 actions), replay-sized batch.
    # Batch is deliberately not a multiple of the 128-row tile to exercise the
    # padding + grid path.
    batch = 200
    input_features = 4
    output_features = 2

    params = init_dqn_params(k_params, input_features, output_features)
    x = jax.random.normal(k_x, (batch, input_features), jnp.float32)

    out = dqn_forward(x, params)
    jax.block_until_ready(out)

    ref = dqn_reference(x, params)
    assert out.shape == (batch, output_features)
    # Layers 2/3 use bf16 MXU operands (f32 accumulation), so compare against
    # the f32 reference with a correspondingly loosened tolerance.
    assert jnp.allclose(out, ref, atol=2e-2, rtol=2e-2), (
        float(jnp.max(jnp.abs(out - ref))))

    print("KERNEL_OK")
</pallas_src>

<mosaic_0001>
module attributes {stable_mosaic.version = 11 : i64} {
  func.func @dqn_kernel(%arg0: i32, %arg1: memref<128x8xf32, #tpu.memory_space<vmem>>, %arg2: memref<8x128xf32, #tpu.memory_space<vmem>>, %arg3: memref<1x128xf32, #tpu.memory_space<vmem>>, %arg4: memref<128x128xbf16, #tpu.memory_space<vmem>>, %arg5: memref<1x128xf32, #tpu.memory_space<vmem>>, %arg6: memref<128x128xbf16, #tpu.memory_space<vmem>>, %arg7: memref<1x128xf32, #tpu.memory_space<vmem>>, %arg8: memref<128x128xf32, #tpu.memory_space<vmem>>) attributes {dimension_semantics = [#tpu.dimension_semantics<parallel>], iteration_bounds = array<i64: 2>, scalar_prefetch = 0 : i64, scratch_operands = 0 : i64, tpu.core_type = #tpu.core_type<tc>, window_params = [{transform_indices = @transform_0, window_bounds = array<i64: 128, 8>}, {pipeline_mode = #tpu.pipeline_mode<synchronous>, transform_indices = @transform_1, window_bounds = array<i64: 8, 128>}, {pipeline_mode = #tpu.pipeline_mode<synchronous>, transform_indices = @transform_2, window_bounds = array<i64: 1, 128>}, {pipeline_mode = #tpu.pipeline_mode<synchronous>, transform_indices = @transform_3, window_bounds = array<i64: 128, 128>}, {pipeline_mode = #tpu.pipeline_mode<synchronous>, transform_indices = @transform_4, window_bounds = array<i64: 1, 128>}, {pipeline_mode = #tpu.pipeline_mode<synchronous>, transform_indices = @transform_5, window_bounds = array<i64: 128, 128>}, {pipeline_mode = #tpu.pipeline_mode<synchronous>, transform_indices = @transform_6, window_bounds = array<i64: 1, 128>}, {transform_indices = @transform_7, window_bounds = array<i64: 128, 128>}]} {
    %c0 = arith.constant 0 : index
    %c0_0 = arith.constant 0 : index
    %0 = vector.load %arg1[%c0, %c0_0] : memref<128x8xf32, #tpu.memory_space<vmem>>, vector<128x8xf32>
    %c0_1 = arith.constant 0 : index
    %c0_2 = arith.constant 0 : index
    %1 = vector.load %arg2[%c0_1, %c0_2] : memref<8x128xf32, #tpu.memory_space<vmem>>, vector<8x128xf32>
    %c0_3 = arith.constant 0 : index
    %c0_4 = arith.constant 0 : index
    %2 = vector.load %arg3[%c0_3, %c0_4] : memref<1x128xf32, #tpu.memory_space<vmem>>, vector<1x128xf32>
    %3 = vector.shape_cast %2 : vector<1x128xf32> to vector<1x128xf32>
    %4 = vector.broadcast %3 : vector<1x128xf32> to vector<128x128xf32>
    %5 = vector.extract_strided_slice %0 {offsets = [0, 0], sizes = [128, 1], strides = [1, 1]} : vector<128x8xf32> to vector<128x1xf32>
    %6 = vector.extract_strided_slice %1 {offsets = [0, 0], sizes = [1, 128], strides = [1, 1]} : vector<8x128xf32> to vector<1x128xf32>
    %7 = vector.broadcast %5 : vector<128x1xf32> to vector<128x128xf32>
    %8 = vector.broadcast %6 : vector<1x128xf32> to vector<128x128xf32>
    %9 = arith.mulf %7, %8 : vector<128x128xf32>
    %10 = arith.addf %4, %9 : vector<128x128xf32>
    %11 = vector.extract_strided_slice %0 {offsets = [0, 1], sizes = [128, 1], strides = [1, 1]} : vector<128x8xf32> to vector<128x1xf32>
    %12 = vector.extract_strided_slice %1 {offsets = [1, 0], sizes = [1, 128], strides = [1, 1]} : vector<8x128xf32> to vector<1x128xf32>
    %13 = vector.broadcast %11 : vector<128x1xf32> to vector<128x128xf32>
    %14 = vector.broadcast %12 : vector<1x128xf32> to vector<128x128xf32>
    %15 = arith.mulf %13, %14 : vector<128x128xf32>
    %16 = arith.addf %10, %15 : vector<128x128xf32>
    %17 = vector.extract_strided_slice %0 {offsets = [0, 2], sizes = [128, 1], strides = [1, 1]} : vector<128x8xf32> to vector<128x1xf32>
    %18 = vector.extract_strided_slice %1 {offsets = [2, 0], sizes = [1, 128], strides = [1, 1]} : vector<8x128xf32> to vector<1x128xf32>
    %19 = vector.broadcast %17 : vector<128x1xf32> to vector<128x128xf32>
    %20 = vector.broadcast %18 : vector<1x128xf32> to vector<128x128xf32>
    %21 = arith.mulf %19, %20 : vector<128x128xf32>
    %22 = arith.addf %16, %21 : vector<128x128xf32>
    %23 = vector.extract_strided_slice %0 {offsets = [0, 3], sizes = [128, 1], strides = [1, 1]} : vector<128x8xf32> to vector<128x1xf32>
    %24 = vector.extract_strided_slice %1 {offsets = [3, 0], sizes = [1, 128], strides = [1, 1]} : vector<8x128xf32> to vector<1x128xf32>
    %25 = vector.broadcast %23 : vector<128x1xf32> to vector<128x128xf32>
    %26 = vector.broadcast %24 : vector<1x128xf32> to vector<128x128xf32>
    %27 = arith.mulf %25, %26 : vector<128x128xf32>
    %28 = arith.addf %22, %27 : vector<128x128xf32>
    %29 = vector.extract_strided_slice %0 {offsets = [0, 4], sizes = [128, 1], strides = [1, 1]} : vector<128x8xf32> to vector<128x1xf32>
    %30 = vector.extract_strided_slice %1 {offsets = [4, 0], sizes = [1, 128], strides = [1, 1]} : vector<8x128xf32> to vector<1x128xf32>
    %31 = vector.broadcast %29 : vector<128x1xf32> to vector<128x128xf32>
    %32 = vector.broadcast %30 : vector<1x128xf32> to vector<128x128xf32>
    %33 = arith.mulf %31, %32 : vector<128x128xf32>
    %34 = arith.addf %28, %33 : vector<128x128xf32>
    %35 = vector.extract_strided_slice %0 {offsets = [0, 5], sizes = [128, 1], strides = [1, 1]} : vector<128x8xf32> to vector<128x1xf32>
    %36 = vector.extract_strided_slice %1 {offsets = [5, 0], sizes = [1, 128], strides = [1, 1]} : vector<8x128xf32> to vector<1x128xf32>
    %37 = vector.broadcast %35 : vector<128x1xf32> to vector<128x128xf32>
    %38 = vector.broadcast %36 : vector<1x128xf32> to vector<128x128xf32>
    %39 = arith.mulf %37, %38 : vector<128x128xf32>
    %40 = arith.addf %34, %39 : vector<128x128xf32>
    %41 = vector.extract_strided_slice %0 {offsets = [0, 6], sizes = [128, 1], strides = [1, 1]} : vector<128x8xf32> to vector<128x1xf32>
    %42 = vector.extract_strided_slice %1 {offsets = [6, 0], sizes = [1, 128], strides = [1, 1]} : vector<8x128xf32> to vector<1x128xf32>
    %43 = vector.broadcast %41 : vector<128x1xf32> to vector<128x128xf32>
    %44 = vector.broadcast %42 : vector<1x128xf32> to vector<128x128xf32>
    %45 = arith.mulf %43, %44 : vector<128x128xf32>
    %46 = arith.addf %40, %45 : vector<128x128xf32>
    %47 = vector.extract_strided_slice %0 {offsets = [0, 7], sizes = [128, 1], strides = [1, 1]} : vector<128x8xf32> to vector<128x1xf32>
    %48 = vector.extract_strided_slice %1 {offsets = [7, 0], sizes = [1, 128], strides = [1, 1]} : vector<8x128xf32> to vector<1x128xf32>
    %49 = vector.broadcast %47 : vector<128x1xf32> to vector<128x128xf32>
    %50 = vector.broadcast %48 : vector<1x128xf32> to vector<128x128xf32>
    %51 = arith.mulf %49, %50 : vector<128x128xf32>
    %52 = arith.addf %46, %51 : vector<128x128xf32>
    %cst = arith.constant 0.000000e+00 : f32
    %53 = vector.broadcast %cst : f32 to vector<128x128xf32>
    %54 = arith.maximumf %52, %53 : vector<128x128xf32>
    %55 = arith.truncf %54 : vector<128x128xf32> to vector<128x128xbf16>
    %c0_5 = arith.constant 0 : index
    %c0_6 = arith.constant 0 : index
    %56 = vector.load %arg4[%c0_5, %c0_6] : memref<128x128xbf16, #tpu.memory_space<vmem>>, vector<128x128xbf16>
    %cst_7 = arith.constant dense<0.000000e+00> : vector<128x128xf32>
    %57 = tpu.matmul %55, %56, %cst_7 {dimension_numbers = #tpu.dot_dimension_numbers<[1], [0], [0], [1], [0, 0, 1, 1], [], []>} : vector<128x128xbf16>, vector<128x128xbf16>, vector<128x128xf32> -> vector<128x128xf32>
    %c0_8 = arith.constant 0 : index
    %c0_9 = arith.constant 0 : index
    %58 = vector.load %arg5[%c0_8, %c0_9] : memref<1x128xf32, #tpu.memory_space<vmem>>, vector<1x128xf32>
    %59 = vector.broadcast %58 : vector<1x128xf32> to vector<128x128xf32>
    %60 = arith.addf %57, %59 : vector<128x128xf32>
    %cst_10 = arith.constant 0.000000e+00 : f32
    %61 = vector.broadcast %cst_10 : f32 to vector<128x128xf32>
    %62 = arith.maximumf %60, %61 : vector<128x128xf32>
    %63 = arith.truncf %62 : vector<128x128xf32> to vector<128x128xbf16>
    %c0_11 = arith.constant 0 : index
    %c0_12 = arith.constant 0 : index
    %64 = vector.load %arg6[%c0_11, %c0_12] : memref<128x128xbf16, #tpu.memory_space<vmem>>, vector<128x128xbf16>
    %cst_13 = arith.constant dense<0.000000e+00> : vector<128x128xf32>
    %65 = tpu.matmul %63, %64, %cst_13 {dimension_numbers = #tpu.dot_dimension_numbers<[1], [0], [0], [1], [0, 0, 1, 1], [], []>} : vector<128x128xbf16>, vector<128x128xbf16>, vector<128x128xf32> -> vector<128x128xf32>
    %c0_14 = arith.constant 0 : index
    %c0_15 = arith.constant 0 : index
    %66 = vector.load %arg7[%c0_14, %c0_15] : memref<1x128xf32, #tpu.memory_space<vmem>>, vector<1x128xf32>
    %67 = vector.broadcast %66 : vector<1x128xf32> to vector<128x128xf32>
    %68 = arith.addf %65, %67 : vector<128x128xf32>
    %c0_16 = arith.constant 0 : index
    %c0_17 = arith.constant 0 : index
    %69 = vector.load %arg8[%c0_16, %c0_17] : memref<128x128xf32, #tpu.memory_space<vmem>>, vector<128x128xf32>
    tpu.vector_store %arg8[%c0_16, %c0_17], %68 {strides = array<i32>} : memref<128x128xf32, #tpu.memory_space<vmem>>, vector<128x128xf32>,
    return
  }
  func.func @transform_0(%arg0: i32) -> (i32, i32) {
    %c0_i32 = arith.constant 0 : i32
    %c0_i32_0 = arith.constant 0 : i32
    return %arg0, %c0_i32 : i32, i32
  }
  func.func @transform_1(%arg0: i32) -> (i32, i32) {
    %c0_i32 = arith.constant 0 : i32
    %c0_i32_0 = arith.constant 0 : i32
    %c0_i32_1 = arith.constant 0 : i32
    return %c0_i32, %c0_i32_0 : i32, i32
  }
  func.func @transform_2(%arg0: i32) -> (i32, i32) {
    %c0_i32 = arith.constant 0 : i32
    %c0_i32_0 = arith.constant 0 : i32
    %c0_i32_1 = arith.constant 0 : i32
    return %c0_i32, %c0_i32_0 : i32, i32
  }
  func.func @transform_3(%arg0: i32) -> (i32, i32) {
    %c0_i32 = arith.constant 0 : i32
    %c0_i32_0 = arith.constant 0 : i32
    %c0_i32_1 = arith.constant 0 : i32
    return %c0_i32, %c0_i32_0 : i32, i32
  }
  func.func @transform_4(%arg0: i32) -> (i32, i32) {
    %c0_i32 = arith.constant 0 : i32
    %c0_i32_0 = arith.constant 0 : i32
    %c0_i32_1 = arith.constant 0 : i32
    return %c0_i32, %c0_i32_0 : i32, i32
  }
  func.func @transform_5(%arg0: i32) -> (i32, i32) {
    %c0_i32 = arith.constant 0 : i32
    %c0_i32_0 = arith.constant 0 : i32
    %c0_i32_1 = arith.constant 0 : i32
    return %c0_i32, %c0_i32_0 : i32, i32
  }
  func.func @transform_6(%arg0: i32) -> (i32, i32) {
    %c0_i32 = arith.constant 0 : i32
    %c0_i32_0 = arith.constant 0 : i32
    %c0_i32_1 = arith.constant 0 : i32
    return %c0_i32, %c0_i32_0 : i32, i32
  }
  func.func @transform_7(%arg0: i32) -> (i32, i32) {
    %c0_i32 = arith.constant 0 : i32
    %c0_i32_0 = arith.constant 0 : i32
    return %arg0, %c0_i32 : i32, i32
  }
}

</mosaic_0001>

<llo_original>
// kernel: tpu_custom_call.1
$region0: #{tpu_custom_call.1}
  #allocation0 [shape = 'u32[]', space=smem, size = 0x4, offset = 0x4, fixed_abs, tag = 'smem constant byte address 0x4 - core index']
  #allocation1 [shape = 'u32[144,128]{1,0:T(1,128)}', space=vmem, size = 0x12000, scoped, tag = 'internal scratch']
  %s0 = inlined_call_operand.vmem [shape: f32[256,8], index: 0, kind: input, shape index: {}]
  %s1 = inlined_call_operand.vmem [shape: f32[8,128], index: 1, kind: input, shape index: {}]
  %s2 = inlined_call_operand.vmem [shape: f32[1,128], index: 2, kind: input, shape index: {}]
  %s3 = inlined_call_operand.vmem [shape: bf16[128,128], index: 3, kind: input, shape index: {}]
  %s4 = inlined_call_operand.vmem [shape: f32[1,128], index: 4, kind: input, shape index: {}]
  %s5 = inlined_call_operand.vmem [shape: bf16[128,128], index: 5, kind: input, shape index: {}]
  %s6 = inlined_call_operand.vmem [shape: f32[1,128], index: 6, kind: input, shape index: {}]
  %s7 = inlined_call_operand.hbm [shape: f32[256,128], index: 7, kind: output, shape index: {}]
  %s8 = sld [smem:[#allocation0]]
  $region61: #{tpu_custom_call.1} parent=0
    _
  %s10 = ssub.s32 1, %s8
  %s11 = scalar_select 0, %s10, %s8
  $region1: #{tpu_custom_call.1} parent=0
    #allocation2 [shape = 'u8[131072]{0}', space=vmem, size = 0x20000, scoped, tag = 'output window, operand 0']
    #allocation3 [shape = 's32[2]{0}', space=sflag, size = 0x8, scoped, tag = 'scoped memory for tpu_custom_call.1']
    %12 = vsyncpa [#allocation3], 0
    %s13 = scalar_lea.sflag [#allocation3], 1
    %14 = vsyncpa %s13, 0
    loop: start=0, step=1, limit=4
    $region2: #{tpu_custom_call.1} parent=1 // loop_pre_header
      _
    $region3: #{tpu_custom_call.1} parent=1 // loop_header
      %s16 = sphi 0, %s20
      %p17 = scmp.ge.s32.totalorder %s16, 4
      %s26 = sphi 0, %s28
      %s29 = sphi 0, %s26
      %s30 = sphi 0, %s29
      %s46 = sphi 0, %s30
      %s50 = sphi 0, %s50
      %s52 = sphi 0, %s50
      %s53 = sphi 0, %s52
      %s67 = sphi 0, %s53
      %s71 = sphi 0, %s71
      %s73 = sphi 0, %s71
      %s74 = sphi 0, %s73
      %s88 = sphi 0, %s74
      %s92 = sphi 0, %s92
      %s94 = sphi 0, %s92
      %s95 = sphi 0, %s94
      %s109 = sphi 0, %s95
      %s113 = sphi 0, %s113
      %s115 = sphi 0, %s113
      %s116 = sphi 0, %s115
      %s130 = sphi 0, %s116
      %s134 = sphi 0, %s134
      %s136 = sphi 0, %s134
      %s137 = sphi 0, %s136
      %s151 = sphi 0, %s137
      %s155 = sphi 0, %s155
      %s157 = sphi 0, %s155
      %s158 = sphi 0, %s157
      %s172 = sphi 0, %s158
      %s178 = sphi 0, %s180
      %s181 = sphi 0, %s178
      %s182 = sphi 0, %s181
      %s198 = sphi 0, %s182
    $region4: #{tpu_custom_call.1} parent=1 // loop_header_branch
      %19 = sbr.rel (%p17) target = $region8
    $region5: #{tpu_custom_call.1} parent=1 // loop_body
      %s21 = ssub.s32 %s16, 1
      %s22 = ssub.s32 %s16, 2
      %s23 = sadd.s32 %s16, 1
      %s24 = ssub.s32 %s16, %s23
      %p25 = scmp.eq.s32.totalorder %s24, 0
      %s27 = sadd.s32 %s26, 1
      %s28 = scalar_select %p25, %s26, %s27
      %p31 = pneg %p25
      %p32 = scmp.eq.s32.totalorder %s16, 1
      %p33 = por %p31, %p32
      %p34 = scmp.ne.s32.totalorder %s26, %s29
      %p35 = scmp.eq.s32.totalorder %s16, 0
      %p36 = por %p34, %p35
      %p37 = scmp.ne.s32.totalorder %s26, %s29
      %p38 = scmp.eq.s32.totalorder %s21, 1
      %p39 = por %p37, %p38
      %p40 = scmp.ne.s32.totalorder %s29, %s30
      %p41 = scmp.eq.s32.totalorder %s21, 0
      %p42 = por %p40, %p41
      %p43 = scmp.ne.s32.totalorder %s29, %s30
      %p44 = scmp.eq.s32.totalorder %s22, 1
      %p45 = por %p43, %p44
      %p47 = scmp.ne.s32.totalorder %s30, %s46
      %p48 = scmp.eq.s32.totalorder %s22, 0
      %p49 = por %p47, %p48
      %s51 = sadd.s32 %s50, 1
      %p54 = scmp.eq.s32.totalorder %s16, 1
      %p55 = scmp.ne.s32.totalorder %s50, %s52
      %p56 = scmp.eq.s32.totalorder %s16, 0
      %p57 = por %p55, %p56
      %p58 = scmp.ne.s32.totalorder %s50, %s52
      %p59 = scmp.eq.s32.totalorder %s21, 1
      %p60 = por %p58, %p59
      %p61 = scmp.ne.s32.totalorder %s52, %s53
      %p62 = scmp.eq.s32.totalorder %s21, 0
      %p63 = por %p61, %p62
      %p64 = scmp.ne.s32.totalorder %s52, %s53
      %p65 = scmp.eq.s32.totalorder %s22, 1
      %p66 = por %p64, %p65
      %p68 = scmp.ne.s32.totalorder %s53, %s67
      %p69 = scmp.eq.s32.totalorder %s22, 0
      %p70 = por %p68, %p69
      %s72 = sadd.s32 %s71, 1
      %p75 = scmp.eq.s32.totalorder %s16, 1
      %p76 = scmp.ne.s32.totalorder %s71, %s73
      %p77 = scmp.eq.s32.totalorder %s16, 0
      %p78 = por %p76, %p77
      %p79 = scmp.ne.s32.totalorder %s71, %s73
      %p80 = scmp.eq.s32.totalorder %s21, 1
      %p81 = por %p79, %p80
      %p82 = scmp.ne.s32.totalorder %s73, %s74
      %p83 = scmp.eq.s32.totalorder %s21, 0
      %p84 = por %p82, %p83
      %p85 = scmp.ne.s32.totalorder %s73, %s74
      %p86 = scmp.eq.s32.totalorder %s22, 1
      %p87 = por %p85, %p86
      %p89 = scmp.ne.s32.totalorder %s74, %s88
      %p90 = scmp.eq.s32.totalorder %s22, 0
      %p91 = por %p89, %p90
      %s93 = sadd.s32 %s92, 1
      %p96 = scmp.eq.s32.totalorder %s16, 1
      %p97 = scmp.ne.s32.totalorder %s92, %s94
      %p98 = scmp.eq.s32.totalorder %s16, 0
      %p99 = por %p97, %p98
      %p100 = scmp.ne.s32.totalorder %s92, %s94
      %p101 = scmp.eq.s32.totalorder %s21, 1
      %p102 = por %p100, %p101
      %p103 = scmp.ne.s32.totalorder %s94, %s95
      %p104 = scmp.eq.s32.totalorder %s21, 0
      %p105 = por %p103, %p104
      %p106 = scmp.ne.s32.totalorder %s94, %s95
      %p107 = scmp.eq.s32.totalorder %s22, 1
      %p108 = por %p106, %p107
      %p110 = scmp.ne.s32.totalorder %s95, %s109
      %p111 = scmp.eq.s32.totalorder %s22, 0
      %p112 = por %p110, %p111
      %s114 = sadd.s32 %s113, 1
      %p117 = scmp.eq.s32.totalorder %s16, 1
      %p118 = scmp.ne.s32.totalorder %s113, %s115
      %p119 = scmp.eq.s32.totalorder %s16, 0
      %p120 = por %p118, %p119
      %p121 = scmp.ne.s32.totalorder %s113, %s115
      %p122 = scmp.eq.s32.totalorder %s21, 1
      %p123 = por %p121, %p122
      %p124 = scmp.ne.s32.totalorder %s115, %s116
      %p125 = scmp.eq.s32.totalorder %s21, 0
      %p126 = por %p124, %p125
      %p127 = scmp.ne.s32.totalorder %s115, %s116
      %p128 = scmp.eq.s32.totalorder %s22, 1
      %p129 = por %p127, %p128
      %p131 = scmp.ne.s32.totalorder %s116, %s130
      %p132 = scmp.eq.s32.totalorder %s22, 0
      %p133 = por %p131, %p132
      %s135 = sadd.s32 %s134, 1
      %p138 = scmp.eq.s32.totalorder %s16, 1
      %p139 = scmp.ne.s32.totalorder %s134, %s136
      %p140 = scmp.eq.s32.totalorder %s16, 0
      %p141 = por %p139, %p140
      %p142 = scmp.ne.s32.totalorder %s134, %s136
      %p143 = scmp.eq.s32.totalorder %s21, 1
      %p144 = por %p142, %p143
      %p145 = scmp.ne.s32.totalorder %s136, %s137
      %p146 = scmp.eq.s32.totalorder %s21, 0
      %p147 = por %p145, %p146
      %p148 = scmp.ne.s32.totalorder %s136, %s137
      %p149 = scmp.eq.s32.totalorder %s22, 1
      %p150 = por %p148, %p149
      %p152 = scmp.ne.s32.totalorder %s137, %s151
      %p153 = scmp.eq.s32.totalorder %s22, 0
      %p154 = por %p152, %p153
      %s156 = sadd.s32 %s155, 1
      %p159 = scmp.eq.s32.totalorder %s16, 1
      %p160 = scmp.ne.s32.totalorder %s155, %s157
      %p161 = scmp.eq.s32.totalorder %s16, 0
      %p162 = por %p160, %p161
      %p163 = scmp.ne.s32.totalorder %s155, %s157
      %p164 = scmp.eq.s32.totalorder %s21, 1
      %p165 = por %p163, %p164
      %p166 = scmp.ne.s32.totalorder %s157, %s158
      %p167 = scmp.eq.s32.totalorder %s21, 0
      %p168 = por %p166, %p167
      %p169 = scmp.ne.s32.totalorder %s157, %s158
      %p170 = scmp.eq.s32.totalorder %s22, 1
      %p171 = por %p169, %p170
      %p173 = scmp.ne.s32.totalorder %s158, %s172
      %p174 = scmp.eq.s32.totalorder %s22, 0
      %p175 = por %p173, %p174
      %s176 = ssub.s32 %s16, %s23
      %p177 = scmp.eq.s32.totalorder %s176, 0
      %s179 = sadd.s32 %s178, 1
      %s180 = scalar_select %p177, %s178, %s179
      %p183 = pneg %p177
      %p184 = scmp.eq.s32.totalorder %s16, 1
      %p185 = por %p183, %p184
      %p186 = scmp.ne.s32.totalorder %s178, %s181
      %p187 = scmp.eq.s32.totalorder %s16, 0
      %p188 = por %p186, %p187
      %p189 = scmp.ne.s32.totalorder %s178, %s181
      %p190 = scmp.eq.s32.totalorder %s21, 1
      %p191 = por %p189, %p190
      %p192 = scmp.ne.s32.totalorder %s181, %s182
      %p193 = scmp.eq.s32.totalorder %s21, 0
      %p194 = por %p192, %p193
      %p195 = scmp.ne.s32.totalorder %s181, %s182
      %p196 = scmp.eq.s32.totalorder %s22, 1
      %p197 = por %p195, %p196
      %p199 = scmp.ne.s32.totalorder %s182, %s198
      %p200 = scmp.eq.s32.totalorder %s22, 0
      %p201 = por %p199, %p200
      %p202 = scmp.le.s32.totalorder 1, %s16
      %p203 = scmp.lt.s32.totalorder %s16, 3
      %p204 = pnand %p202, %p203
      %p205 = pneg %p204
      // Predicated region
      $region9: #{tpu_custom_call.1} parent=5 // pred_check
        _
      $region10: #{tpu_custom_call.1} parent=5 // pred_check_branch
        %207 = sbr.rel (%p204) target = $region12
      $region11: #{tpu_custom_call.1} parent=5 // pred_region
        %s208 = ssub.s32 %s16, 1
        // Predicated region
        $region13: #{tpu_custom_call.1} parent=11 // pred_check
          %p209 = pneg %p63
        $region14: #{tpu_custom_call.1} parent=11 // pred_check_branch
          %211 = sbr.rel (%p209) target = $region16
        $region15: #{tpu_custom_call.1} parent=11 // pred_region
          _
        $region16: #{tpu_custom_call.1} parent=11 // pred_fallthru
          _
        // Predicated region
        $region17: #{tpu_custom_call.1} parent=11 // pred_check
          %p212 = pneg %p84
        $region18: #{tpu_custom_call.1} parent=11 // pred_check_branch
          %214 = sbr.rel (%p212) target = $region20
        $region19: #{tpu_custom_call.1} parent=11 // pred_region
          _
        $region20: #{tpu_custom_call.1} parent=11 // pred_fallthru
          _
        // Predicated region
        $region21: #{tpu_custom_call.1} parent=11 // pred_check
          %p215 = pneg %p105
        $region22: #{tpu_custom_call.1} parent=11 // pred_check_branch
          %217 = sbr.rel (%p215) target = $region24
        $region23: #{tpu_custom_call.1} parent=11 // pred_region
          _
        $region24: #{tpu_custom_call.1} parent=11 // pred_fallthru
          _
        // Predicated region
        $region25: #{tpu_custom_call.1} parent=11 // pred_check
          %p218 = pneg %p126
        $region26: #{tpu_custom_call.1} parent=11 // pred_check_branch
          %220 = sbr.rel (%p218) target = $region28
        $region27: #{tpu_custom_call.1} parent=11 // pred_region
          _
        $region28: #{tpu_custom_call.1} parent=11 // pred_fallthru
          _
        // Predicated region
        $region29: #{tpu_custom_call.1} parent=11 // pred_check
          %p221 = pneg %p147
        $region30: #{tpu_custom_call.1} parent=11 // pred_check_branch
          %223 = sbr.rel (%p221) target = $region32
        $region31: #{tpu_custom_call.1} parent=11 // pred_region
          _
        $region32: #{tpu_custom_call.1} parent=11 // pred_fallthru
          _
        // Predicated region
        $region33: #{tpu_custom_call.1} parent=11 // pred_check
          %p224 = pneg %p168
        $region34: #{tpu_custom_call.1} parent=11 // pred_check_branch
          %226 = sbr.rel (%p224) target = $region36
        $region35: #{tpu_custom_call.1} parent=11 // pred_region
          _
        $region36: #{tpu_custom_call.1} parent=11 // pred_fallthru
          _
      $region12: #{tpu_custom_call.1} parent=5 // pred_fallthru
        _
      %p227 = scmp.lt.s32.totalorder %s16, 2
      // Predicated region
      $region37: #{tpu_custom_call.1} parent=5 // pred_check
        %p228 = pneg %p227
      $region38: #{tpu_custom_call.1} parent=5 // pred_check_branch
        %230 = sbr.rel (%p228) target = $region40
      $region39: #{tpu_custom_call.1} parent=5 // pred_region
        // Predicated region
        $region41: #{tpu_custom_call.1} parent=39 // pred_check
          %p231 = pneg %p36
        $region42: #{tpu_custom_call.1} parent=39 // pred_check_branch
          %233 = sbr.rel (%p231) target = $region44
        $region43: #{tpu_custom_call.1} parent=39 // pred_region
          %s234 = smul.u32 16, %s16
          %p235 = scmp.lt.s32.totalorder %s234, 31
          %s236 = scalar_select %p235, %s234, 31
          %s237 = smul.addr %s236, 8
          %s238 = scalar_lea.vmem %s0, %s237
          %s239 = smul.u32 16, %s16
        $region44: #{tpu_custom_call.1} parent=39 // pred_fallthru
          _
      $region40: #{tpu_custom_call.1} parent=5 // pred_fallthru
        _
      %p240 = scmp.le.s32.totalorder 1, %s16
      %p241 = scmp.lt.s32.totalorder %s16, 3
      %p242 = pnand %p240, %p241
      %p243 = pneg %p242
      // Predicated region
      $region45: #{tpu_custom_call.1} parent=5 // pred_check
        _
      $region46: #{tpu_custom_call.1} parent=5 // pred_check_branch
        %245 = sbr.rel (%p242) target = $region48
      $region47: #{tpu_custom_call.1} parent=5 // pred_region
        %s246 = ssub.s32 %s16, 1
        %s247 = smul.u32 16, %s21
        %p248 = scmp.lt.s32.totalorder %s247, 31
        %s249 = scalar_select %p248, %s247, 31
        %s250 = smul.addr %s249, 8
        %s251 = scalar_lea.vmem %s0, %s250
        %p252 = pneg %p42
        %p253 = pneg %p39
        %p254 = pneg %p63
        %p255 = pneg %p60
        %p256 = pneg %p84
        %p257 = pneg %p81
        %p258 = pneg %p105
        %p259 = pneg %p102
        %p260 = pneg %p126
        %p261 = pneg %p123
        %p262 = pneg %p147
        %p263 = pneg %p144
        %p264 = pneg %p168
        %p265 = pneg %p165
        %p266 = pneg %p194
        %p267 = pneg %p191
        %s268 = sand.u32 %s181, 1
        %s269 = scalar_lea.sflag [#allocation3], %s268
        %s270 = sand.u32 %s181, 1
        %s271 = smul.addr %s270, 128
        %s272 = scalar_lea.vmem [#allocation2], %s271
        %s273 = smul.u32 16, %s21
        %p274 = scmp.lt.s32.totalorder %s273, 31
        %s275 = scalar_select %p274, %s273, 31
        %s276 = smul.addr %s275, 8
        %s277 = scalar_lea.vmem %s0, %s276
        %s278 = smul.u32 16, %s21
        %s279 = smul.u32 16, %s21
        %v281 = vld [vmem:[%s277] sm:$0xff]
        %v282 = vld [vmem:[%s277 + $0x8] sm:$0xff]
        %v283 = vld [vmem:[%s277 + $0x10] sm:$0xff]
        %v284 = vld [vmem:[%s277 + $0x18] sm:$0xff]
        %v285 = vld [vmem:[%s277 + $0x20] sm:$0xff]
        %v286 = vld [vmem:[%s277 + $0x28] sm:$0xff]
        %v287 = vld [vmem:[%s277 + $0x30] sm:$0xff]
        %v288 = vld [vmem:[%s277 + $0x38] sm:$0xff]
        %v289 = vld [vmem:[%s277 + $0x40] sm:$0xff]
        %v290 = vld [vmem:[%s277 + $0x48] sm:$0xff]
        %v291 = vld [vmem:[%s277 + $0x50] sm:$0xff]
        %v292 = vld [vmem:[%s277 + $0x58] sm:$0xff]
        %v293 = vld [vmem:[%s277 + $0x60] sm:$0xff]
        %v294 = vld [vmem:[%s277 + $0x68] sm:$0xff]
        %v295 = vld [vmem:[%s277 + $0x70] sm:$0xff]
        %v296 = vld [vmem:[%s277 + $0x78] sm:$0xff]
        %v297 = vld [vmem:[%s1] sm:$0xff]
        %v298 = vld [vmem:[%s2] sm:$0x1]
        %v300 = vlaneseq
        %v301 = vshrl.u32 %v300, 7
        %v302 = vsub.s32 0, %v301
        %v303 = vrot.slane %v298, %v302
        %306 = vset.pattern.permute.xlu0 0
        %307 = vperm.xlu0 %306, %v281
        %v308 = vpop.permute.xlu0 %307
        %311 = vset.pattern.permute.xlu0 0
        %312 = vperm.xlu0 %311, %v282
        %v313 = vpop.permute.xlu0 %312
        %316 = vset.pattern.permute.xlu0 0
        %317 = vperm.xlu0 %316, %v283
        %v318 = vpop.permute.xlu0 %317
        %321 = vset.pattern.permute.xlu0 0
        %322 = vperm.xlu0 %321, %v284
        %v323 = vpop.permute.xlu0 %322
        %326 = vset.pattern.permute.xlu0 0
        %327 = vperm.xlu0 %326, %v285
        %v328 = vpop.permute.xlu0 %327
        %331 = vset.pattern.permute.xlu0 0
        %332 = vperm.xlu0 %331, %v286
        %v333 = vpop.permute.xlu0 %332
        %336 = vset.pattern.permute.xlu0 0
        %337 = vperm.xlu0 %336, %v287
        %v338 = vpop.permute.xlu0 %337
        %341 = vset.pattern.permute.xlu0 0
        %342 = vperm.xlu0 %341, %v288
        %v343 = vpop.permute.xlu0 %342
        %346 = vset.pattern.permute.xlu0 0
        %347 = vperm.xlu0 %346, %v289
        %v348 = vpop.permute.xlu0 %347
        %351 = vset.pattern.permute.xlu0 0
        %352 = vperm.xlu0 %351, %v290
        %v353 = vpop.permute.xlu0 %352
        %356 = vset.pattern.permute.xlu0 0
        %357 = vperm.xlu0 %356, %v291
        %v358 = vpop.permute.xlu0 %357
        %361 = vset.pattern.permute.xlu0 0
        %362 = vperm.xlu0 %361, %v292
        %v363 = vpop.permute.xlu0 %362
        %366 = vset.pattern.permute.xlu0 0
        %367 = vperm.xlu0 %366, %v293
        %v368 = vpop.permute.xlu0 %367
        %371 = vset.pattern.permute.xlu0 0
        %372 = vperm.xlu0 %371, %v294
        %v373 = vpop.permute.xlu0 %372
        %376 = vset.pattern.permute.xlu0 0
        %377 = vperm.xlu0 %376, %v295
        %v378 = vpop.permute.xlu0 %377
        %381 = vset.pattern.permute.xlu0 0
        %382 = vperm.xlu0 %381, %v296
        %v383 = vpop.permute.xlu0 %382
        %v385 = vlaneseq
        %v386 = vshrl.u32 %v385, 7
        %v387 = vsub.s32 0, %v386
        %v388 = vrot.slane %v297, %v387
        %v389 = vmul.f32 %v308, %v388
        %v390 = vmul.f32 %v313, %v388
        %v391 = vmul.f32 %v318, %v388
        %v392 = vmul.f32 %v323, %v388
        %v393 = vmul.f32 %v328, %v388
        %v394 = vmul.f32 %v333, %v388
        %v395 = vmul.f32 %v338, %v388
        %v396 = vmul.f32 %v343, %v388
        %v397 = vmul.f32 %v348, %v388
        %v398 = vmul.f32 %v353, %v388
        %v399 = vmul.f32 %v358, %v388
        %v400 = vmul.f32 %v363, %v388
        %v401 = vmul.f32 %v368, %v388
        %v402 = vmul.f32 %v373, %v388
        %v403 = vmul.f32 %v378, %v388
        %v404 = vmul.f32 %v383, %v388
        %v405 = vadd.f32 %v303, %v389
        %v406 = vadd.f32 %v303, %v390
        %v407 = vadd.f32 %v303, %v391
        %v408 = vadd.f32 %v303, %v392
        %v409 = vadd.f32 %v303, %v393
        %v410 = vadd.f32 %v303, %v394
        %v411 = vadd.f32 %v303, %v395
        %v412 = vadd.f32 %v303, %v396
        %v413 = vadd.f32 %v303, %v397
        %v414 = vadd.f32 %v303, %v398
        %v415 = vadd.f32 %v303, %v399
        %v416 = vadd.f32 %v303, %v400
        %v417 = vadd.f32 %v303, %v401
        %v418 = vadd.f32 %v303, %v402
        %v419 = vadd.f32 %v303, %v403
        %v420 = vadd.f32 %v303, %v404
        %421 = vset.pattern.permute.xlu0 1
        %422 = vperm.xlu0 %421, %v281
        %v423 = vpop.permute.xlu0 %422
        %425 = vset.pattern.permute.xlu0 1
        %426 = vperm.xlu0 %425, %v282
        %v427 = vpop.permute.xlu0 %426
        %429 = vset.pattern.permute.xlu0 1
        %430 = vperm.xlu0 %429, %v283
        %v431 = vpop.permute.xlu0 %430
        %433 = vset.pattern.permute.xlu0 1
        %434 = vperm.xlu0 %433, %v284
        %v435 = vpop.permute.xlu0 %434
        %437 = vset.pattern.permute.xlu0 1
        %438 = vperm.xlu0 %437, %v285
        %v439 = vpop.permute.xlu0 %438
        %441 = vset.pattern.permute.xlu0 1
        %442 = vperm.xlu0 %441, %v286
        %v443 = vpop.permute.xlu0 %442
        %445 = vset.pattern.permute.xlu0 1
        %446 = vperm.xlu0 %445, %v287
        %v447 = vpop.permute.xlu0 %446
        %449 = vset.pattern.permute.xlu0 1
        %450 = vperm.xlu0 %449, %v288
        %v451 = vpop.permute.xlu0 %450
        %453 = vset.pattern.permute.xlu0 1
        %454 = vperm.xlu0 %453, %v289
        %v455 = vpop.permute.xlu0 %454
        %457 = vset.pattern.permute.xlu0 1
        %458 = vperm.xlu0 %457, %v290
        %v459 = vpop.permute.xlu0 %458
        %461 = vset.pattern.permute.xlu0 1
        %462 = vperm.xlu0 %461, %v291
        %v463 = vpop.permute.xlu0 %462
        %465 = vset.pattern.permute.xlu0 1
        %466 = vperm.xlu0 %465, %v292
        %v467 = vpop.permute.xlu0 %466
        %469 = vset.pattern.permute.xlu0 1
        %470 = vperm.xlu0 %469, %v293
        %v471 = vpop.permute.xlu0 %470
        %473 = vset.pattern.permute.xlu0 1
        %474 = vperm.xlu0 %473, %v294
        %v475 = vpop.permute.xlu0 %474
        %477 = vset.pattern.permute.xlu0 1
        %478 = vperm.xlu0 %477, %v295
        %v479 = vpop.permute.xlu0 %478
        %481 = vset.pattern.permute.xlu0 1
        %482 = vperm.xlu0 %481, %v296
        %v483 = vpop.permute.xlu0 %482
        %v485 = vlaneseq
        %v486 = vshrl.u32 %v485, 7
        %v487 = vsub.s32 1, %v486
        %v488 = vrot.slane %v297, %v487
        %v489 = vmul.f32 %v423, %v488
        %v490 = vmul.f32 %v427, %v488
        %v491 = vmul.f32 %v431, %v488
        %v492 = vmul.f32 %v435, %v488
        %v493 = vmul.f32 %v439, %v488
        %v494 = vmul.f32 %v443, %v488
        %v495 = vmul.f32 %v447, %v488
        %v496 = vmul.f32 %v451, %v488
        %v497 = vmul.f32 %v455, %v488
        %v498 = vmul.f32 %v459, %v488
        %v499 = vmul.f32 %v463, %v488
        %v500 = vmul.f32 %v467, %v488
        %v501 = vmul.f32 %v471, %v488
        %v502 = vmul.f32 %v475, %v488
        %v503 = vmul.f32 %v479, %v488
        %v504 = vmul.f32 %v483, %v488
        %v505 = vadd.f32 %v405, %v489
        %v506 = vadd.f32 %v406, %v490
        %v507 = vadd.f32 %v407, %v491
        %v508 = vadd.f32 %v408, %v492
        %v509 = vadd.f32 %v409, %v493
        %v510 = vadd.f32 %v410, %v494
        %v511 = vadd.f32 %v411, %v495
        %v512 = vadd.f32 %v412, %v496
        %v513 = vadd.f32 %v413, %v497
        %v514 = vadd.f32 %v414, %v498
        %v515 = vadd.f32 %v415, %v499
        %v516 = vadd.f32 %v416, %v500
        %v517 = vadd.f32 %v417, %v501
        %v518 = vadd.f32 %v418, %v502
        %v519 = vadd.f32 %v419, %v503
        %v520 = vadd.f32 %v420, %v504
        %521 = vset.pattern.permute.xlu0 2
        %522 = vperm.xlu0 %521, %v281
        %v523 = vpop.permute.xlu0 %522
        %525 = vset.pattern.permute.xlu0 2
        %526 = vperm.xlu0 %525, %v282
        %v527 = vpop.permute.xlu0 %526
        %529 = vset.pattern.permute.xlu0 2
        %530 = vperm.xlu0 %529, %v283
        %v531 = vpop.permute.xlu0 %530
        %533 = vset.pattern.permute.xlu0 2
        %534 = vperm.xlu0 %533, %v284
        %v535 = vpop.permute.xlu0 %534
        %537 = vset.pattern.permute.xlu0 2
        %538 = vperm.xlu0 %537, %v285
        %v539 = vpop.permute.xlu0 %538
        %541 = vset.pattern.permute.xlu0 2
        %542 = vperm.xlu0 %541, %v286
        %v543 = vpop.permute.xlu0 %542
        %545 = vset.pattern.permute.xlu0 2
        %546 = vperm.xlu0 %545, %v287
        %v547 = vpop.permute.xlu0 %546
        %549 = vset.pattern.permute.xlu0 2
        %550 = vperm.xlu0 %549, %v288
        %v551 = vpop.permute.xlu0 %550
        %553 = vset.pattern.permute.xlu0 2
        %554 = vperm.xlu0 %553, %v289
        %v555 = vpop.permute.xlu0 %554
        %557 = vset.pattern.permute.xlu0 2
        %558 = vperm.xlu0 %557, %v290
        %v559 = vpop.permute.xlu0 %558
        %561 = vset.pattern.permute.xlu0 2
        %562 = vperm.xlu0 %561, %v291
        %v563 = vpop.permute.xlu0 %562
        %565 = vset.pattern.permute.xlu0 2
        %566 = vperm.xlu0 %565, %v292
        %v567 = vpop.permute.xlu0 %566
        %569 = vset.pattern.permute.xlu0 2
        %570 = vperm.xlu0 %569, %v293
        %v571 = vpop.permute.xlu0 %570
        %573 = vset.pattern.permute.xlu0 2
        %574 = vperm.xlu0 %573, %v294
        %v575 = vpop.permute.xlu0 %574
        %577 = vset.pattern.permute.xlu0 2
        %578 = vperm.xlu0 %577, %v295
        %v579 = vpop.permute.xlu0 %578
        %581 = vset.pattern.permute.xlu0 2
        %582 = vperm.xlu0 %581, %v296
        %v583 = vpop.permute.xlu0 %582
        %v585 = vlaneseq
        %v586 = vshrl.u32 %v585, 7
        %v587 = vsub.s32 2, %v586
        %v588 = vrot.slane %v297, %v587
        %v589 = vmul.f32 %v523, %v588
        %v590 = vmul.f32 %v527, %v588
        %v591 = vmul.f32 %v531, %v588
        %v592 = vmul.f32 %v535, %v588
        %v593 = vmul.f32 %v539, %v588
        %v594 = vmul.f32 %v543, %v588
        %v595 = vmul.f32 %v547, %v588
        %v596 = vmul.f32 %v551, %v588
        %v597 = vmul.f32 %v555, %v588
        %v598 = vmul.f32 %v559, %v588
        %v599 = vmul.f32 %v563, %v588
        %v600 = vmul.f32 %v567, %v588
        %v601 = vmul.f32 %v571, %v588
        %v602 = vmul.f32 %v575, %v588
        %v603 = vmul.f32 %v579, %v588
        %v604 = vmul.f32 %v583, %v588
        %v605 = vadd.f32 %v505, %v589
        %v606 = vadd.f32 %v506, %v590
        %v607 = vadd.f32 %v507, %v591
        %v608 = vadd.f32 %v508, %v592
        %v609 = vadd.f32 %v509, %v593
        %v610 = vadd.f32 %v510, %v594
        %v611 = vadd.f32 %v511, %v595
        %v612 = vadd.f32 %v512, %v596
        %v613 = vadd.f32 %v513, %v597
        %v614 = vadd.f32 %v514, %v598
        %v615 = vadd.f32 %v515, %v599
        %v616 = vadd.f32 %v516, %v600
        %v617 = vadd.f32 %v517, %v601
        %v618 = vadd.f32 %v518, %v602
        %v619 = vadd.f32 %v519, %v603
        %v620 = vadd.f32 %v520, %v604
        %621 = vset.pattern.permute.xlu0 3
        %622 = vperm.xlu0 %621, %v281
        %v623 = vpop.permute.xlu0 %622
        %625 = vset.pattern.permute.xlu0 3
        %626 = vperm.xlu0 %625, %v282
        %v627 = vpop.permute.xlu0 %626
        %629 = vset.pattern.permute.xlu0 3
        %630 = vperm.xlu0 %629, %v283
        %v631 = vpop.permute.xlu0 %630
        %633 = vset.pattern.permute.xlu0 3
        %634 = vperm.xlu0 %633, %v284
        %v635 = vpop.permute.xlu0 %634
        %637 = vset.pattern.permute.xlu0 3
        %638 = vperm.xlu0 %637, %v285
        %v639 = vpop.permute.xlu0 %638
        %641 = vset.pattern.permute.xlu0 3
        %642 = vperm.xlu0 %641, %v286
        %v643 = vpop.permute.xlu0 %642
        %645 = vset.pattern.permute.xlu0 3
        %646 = vperm.xlu0 %645, %v287
        %v647 = vpop.permute.xlu0 %646
        %649 = vset.pattern.permute.xlu0 3
        %650 = vperm.xlu0 %649, %v288
        %v651 = vpop.permute.xlu0 %650
        %653 = vset.pattern.permute.xlu0 3
        %654 = vperm.xlu0 %653, %v289
        %v655 = vpop.permute.xlu0 %654
        %657 = vset.pattern.permute.xlu0 3
        %658 = vperm.xlu0 %657, %v290
        %v659 = vpop.permute.xlu0 %658
        %661 = vset.pattern.permute.xlu0 3
        %662 = vperm.xlu0 %661, %v291
        %v663 = vpop.permute.xlu0 %662
        %665 = vset.pattern.permute.xlu0 3
        %666 = vperm.xlu0 %665, %v292
        %v667 = vpop.permute.xlu0 %666
        %669 = vset.pattern.permute.xlu0 3
        %670 = vperm.xlu0 %669, %v293
        %v671 = vpop.permute.xlu0 %670
        %673 = vset.pattern.permute.xlu0 3
        %674 = vperm.xlu0 %673, %v294
        %v675 = vpop.permute.xlu0 %674
        %677 = vset.pattern.permute.xlu0 3
        %678 = vperm.xlu0 %677, %v295
        %v679 = vpop.permute.xlu0 %678
        %681 = vset.pattern.permute.xlu0 3
        %682 = vperm.xlu0 %681, %v296
        %v683 = vpop.permute.xlu0 %682
        %v685 = vlaneseq
        %v686 = vshrl.u32 %v685, 7
        %v687 = vsub.s32 3, %v686
        %v688 = vrot.slane %v297, %v687
        %v689 = vmul.f32 %v623, %v688
        %v690 = vmul.f32 %v627, %v688
        %v691 = vmul.f32 %v631, %v688
        %v692 = vmul.f32 %v635, %v688
        %v693 = vmul.f32 %v639, %v688
        %v694 = vmul.f32 %v643, %v688
        %v695 = vmul.f32 %v647, %v688
        %v696 = vmul.f32 %v651, %v688
        %v697 = vmul.f32 %v655, %v688
        %v698 = vmul.f32 %v659, %v688
        %v699 = vmul.f32 %v663, %v688
        %v700 = vmul.f32 %v667, %v688
        %v701 = vmul.f32 %v671, %v688
        %v702 = vmul.f32 %v675, %v688
        %v703 = vmul.f32 %v679, %v688
        %v704 = vmul.f32 %v683, %v688
        %v705 = vadd.f32 %v605, %v689
        %v706 = vadd.f32 %v606, %v690
        %v707 = vadd.f32 %v607, %v691
        %v708 = vadd.f32 %v608, %v692
        %v709 = vadd.f32 %v609, %v693
        %v710 = vadd.f32 %v610, %v694
        %v711 = vadd.f32 %v611, %v695
        %v712 = vadd.f32 %v612, %v696
        %v713 = vadd.f32 %v613, %v697
        %v714 = vadd.f32 %v614, %v698
        %v715 = vadd.f32 %v615, %v699
        %v716 = vadd.f32 %v616, %v700
        %v717 = vadd.f32 %v617, %v701
        %v718 = vadd.f32 %v618, %v702
        %v719 = vadd.f32 %v619, %v703
        %v720 = vadd.f32 %v620, %v704
        %721 = vset.pattern.permute.xlu0 4
        %722 = vperm.xlu0 %721, %v281
        %v723 = vpop.permute.xlu0 %722
        %725 = vset.pattern.permute.xlu0 4
        %726 = vperm.xlu0 %725, %v282
        %v727 = vpop.permute.xlu0 %726
        %729 = vset.pattern.permute.xlu0 4
        %730 = vperm.xlu0 %729, %v283
        %v731 = vpop.permute.xlu0 %730
        %733 = vset.pattern.permute.xlu0 4
        %734 = vperm.xlu0 %733, %v284
        %v735 = vpop.permute.xlu0 %734
        %737 = vset.pattern.permute.xlu0 4
        %738 = vperm.xlu0 %737, %v285
        %v739 = vpop.permute.xlu0 %738
        %741 = vset.pattern.permute.xlu0 4
        %742 = vperm.xlu0 %741, %v286
        %v743 = vpop.permute.xlu0 %742
        %745 = vset.pattern.permute.xlu0 4
        %746 = vperm.xlu0 %745, %v287
        %v747 = vpop.permute.xlu0 %746
        %749 = vset.pattern.permute.xlu0 4
        %750 = vperm.xlu0 %749, %v288
        %v751 = vpop.permute.xlu0 %750
        %753 = vset.pattern.permute.xlu0 4
        %754 = vperm.xlu0 %753, %v289
        %v755 = vpop.permute.xlu0 %754
        %757 = vset.pattern.permute.xlu0 4
        %758 = vperm.xlu0 %757, %v290
        %v759 = vpop.permute.xlu0 %758
        %761 = vset.pattern.permute.xlu0 4
        %762 = vperm.xlu0 %761, %v291
        %v763 = vpop.permute.xlu0 %762
        %765 = vset.pattern.permute.xlu0 4
        %766 = vperm.xlu0 %765, %v292
        %v767 = vpop.permute.xlu0 %766
        %769 = vset.pattern.permute.xlu0 4
        %770 = vperm.xlu0 %769, %v293
        %v771 = vpop.permute.xlu0 %770
        %773 = vset.pattern.permute.xlu0 4
        %774 = vperm.xlu0 %773, %v294
        %v775 = vpop.permute.xlu0 %774
        %777 = vset.pattern.permute.xlu0 4
        %778 = vperm.xlu0 %777, %v295
        %v779 = vpop.permute.xlu0 %778
        %781 = vset.pattern.permute.xlu0 4
        %782 = vperm.xlu0 %781, %v296
        %v783 = vpop.permute.xlu0 %782
        %v785 = vlaneseq
        %v786 = vshrl.u32 %v785, 7
        %v787 = vsub.s32 4, %v786
        %v788 = vrot.slane %v297, %v787
        %v789 = vmul.f32 %v723, %v788
        %v790 = vmul.f32 %v727, %v788
        %v791 = vmul.f32 %v731, %v788
        %v792 = vmul.f32 %v735, %v788
        %v793 = vmul.f32 %v739, %v788
        %v794 = vmul.f32 %v743, %v788
        %v795 = vmul.f32 %v747, %v788
        %v796 = vmul.f32 %v751, %v788
        %v797 = vmul.f32 %v755, %v788
        %v798 = vmul.f32 %v759, %v788
        %v799 = vmul.f32 %v763, %v788
        %v800 = vmul.f32 %v767, %v788
        %v801 = vmul.f32 %v771, %v788
        %v802 = vmul.f32 %v775, %v788
        %v803 = vmul.f32 %v779, %v788
        %v804 = vmul.f32 %v783, %v788
        %v805 = vadd.f32 %v705, %v789
        %v806 = vadd.f32 %v706, %v790
        %v807 = vadd.f32 %v707, %v791
        %v808 = vadd.f32 %v708, %v792
        %v809 = vadd.f32 %v709, %v793
        %v810 = vadd.f32 %v710, %v794
        %v811 = vadd.f32 %v711, %v795
        %v812 = vadd.f32 %v712, %v796
        %v813 = vadd.f32 %v713, %v797
        %v814 = vadd.f32 %v714, %v798
        %v815 = vadd.f32 %v715, %v799
        %v816 = vadd.f32 %v716, %v800
        %v817 = vadd.f32 %v717, %v801
        %v818 = vadd.f32 %v718, %v802
        %v819 = vadd.f32 %v719, %v803
        %v820 = vadd.f32 %v720, %v804
        %821 = vset.pattern.permute.xlu0 5
        %822 = vperm.xlu0 %821, %v281
        %v823 = vpop.permute.xlu0 %822
        %825 = vset.pattern.permute.xlu0 5
        %826 = vperm.xlu0 %825, %v282
        %v827 = vpop.permute.xlu0 %826
        %829 = vset.pattern.permute.xlu0 5
        %830 = vperm.xlu0 %829, %v283
        %v831 = vpop.permute.xlu0 %830
        %833 = vset.pattern.permute.xlu0 5
        %834 = vperm.xlu0 %833, %v284
        %v835 = vpop.permute.xlu0 %834
        %837 = vset.pattern.permute.xlu0 5
        %838 = vperm.xlu0 %837, %v285
        %v839 = vpop.permute.xlu0 %838
        %841 = vset.pattern.permute.xlu0 5
        %842 = vperm.xlu0 %841, %v286
        %v843 = vpop.permute.xlu0 %842
        %845 = vset.pattern.permute.xlu0 5
        %846 = vperm.xlu0 %845, %v287
        %v847 = vpop.permute.xlu0 %846
        %849 = vset.pattern.permute.xlu0 5
        %850 = vperm.xlu0 %849, %v288
        %v851 = vpop.permute.xlu0 %850
        %853 = vset.pattern.permute.xlu0 5
        %854 = vperm.xlu0 %853, %v289
        %v855 = vpop.permute.xlu0 %854
        %857 = vset.pattern.permute.xlu0 5
        %858 = vperm.xlu0 %857, %v290
        %v859 = vpop.permute.xlu0 %858
        %861 = vset.pattern.permute.xlu0 5
        %862 = vperm.xlu0 %861, %v291
        %v863 = vpop.permute.xlu0 %862
        %865 = vset.pattern.permute.xlu0 5
        %866 = vperm.xlu0 %865, %v292
        %v867 = vpop.permute.xlu0 %866
        %869 = vset.pattern.permute.xlu0 5
        %870 = vperm.xlu0 %869, %v293
        %v871 = vpop.permute.xlu0 %870
        %873 = vset.pattern.permute.xlu0 5
        %874 = vperm.xlu0 %873, %v294
        %v875 = vpop.permute.xlu0 %874
        %877 = vset.pattern.permute.xlu0 5
        %878 = vperm.xlu0 %877, %v295
        %v879 = vpop.permute.xlu0 %878
        %881 = vset.pattern.permute.xlu0 5
        %882 = vperm.xlu0 %881, %v296
        %v883 = vpop.permute.xlu0 %882
        %v885 = vlaneseq
        %v886 = vshrl.u32 %v885, 7
        %v887 = vsub.s32 5, %v886
        %v888 = vrot.slane %v297, %v887
        %v889 = vmul.f32 %v823, %v888
        %v890 = vmul.f32 %v827, %v888
        %v891 = vmul.f32 %v831, %v888
        %v892 = vmul.f32 %v835, %v888
        %v893 = vmul.f32 %v839, %v888
        %v894 = vmul.f32 %v843, %v888
        %v895 = vmul.f32 %v847, %v888
        %v896 = vmul.f32 %v851, %v888
        %v897 = vmul.f32 %v855, %v888
        %v898 = vmul.f32 %v859, %v888
        %v899 = vmul.f32 %v863, %v888
        %v900 = vmul.f32 %v867, %v888
        %v901 = vmul.f32 %v871, %v888
        %v902 = vmul.f32 %v875, %v888
        %v903 = vmul.f32 %v879, %v888
        %v904 = vmul.f32 %v883, %v888
        %v905 = vadd.f32 %v805, %v889
        %v906 = vadd.f32 %v806, %v890
        %v907 = vadd.f32 %v807, %v891
        %v908 = vadd.f32 %v808, %v892
        %v909 = vadd.f32 %v809, %v893
        %v910 = vadd.f32 %v810, %v894
        %v911 = vadd.f32 %v811, %v895
        %v912 = vadd.f32 %v812, %v896
        %v913 = vadd.f32 %v813, %v897
        %v914 = vadd.f32 %v814, %v898
        %v915 = vadd.f32 %v815, %v899
        %v916 = vadd.f32 %v816, %v900
        %v917 = vadd.f32 %v817, %v901
        %v918 = vadd.f32 %v818, %v902
        %v919 = vadd.f32 %v819, %v903
        %v920 = vadd.f32 %v820, %v904
        %921 = vset.pattern.permute.xlu0 6
        %922 = vperm.xlu0 %921, %v281
        %v923 = vpop.permute.xlu0 %922
        %925 = vset.pattern.permute.xlu0 6
        %926 = vperm.xlu0 %925, %v282
        %v927 = vpop.permute.xlu0 %926
        %929 = vset.pattern.permute.xlu0 6
        %930 = vperm.xlu0 %929, %v283
        %v931 = vpop.permute.xlu0 %930
        %933 = vset.pattern.permute.xlu0 6
        %934 = vperm.xlu0 %933, %v284
        %v935 = vpop.permute.xlu0 %934
        %937 = vset.pattern.permute.xlu0 6
        %938 = vperm.xlu0 %937, %v285
        %v939 = vpop.permute.xlu0 %938
        %941 = vset.pattern.permute.xlu0 6
        %942 = vperm.xlu0 %941, %v286
        %v943 = vpop.permute.xlu0 %942
        %945 = vset.pattern.permute.xlu0 6
        %946 = vperm.xlu0 %945, %v287
        %v947 = vpop.permute.xlu0 %946
        %949 = vset.pattern.permute.xlu0 6
        %950 = vperm.xlu0 %949, %v288
        %v951 = vpop.permute.xlu0 %950
        %953 = vset.pattern.permute.xlu0 6
        %954 = vperm.xlu0 %953, %v289
        %v955 = vpop.permute.xlu0 %954
        %957 = vset.pattern.permute.xlu0 6
        %958 = vperm.xlu0 %957, %v290
        %v959 = vpop.permute.xlu0 %958
        %961 = vset.pattern.permute.xlu0 6
        %962 = vperm.xlu0 %961, %v291
        %v963 = vpop.permute.xlu0 %962
        %965 = vset.pattern.permute.xlu0 6
        %966 = vperm.xlu0 %965, %v292
        %v967 = vpop.permute.xlu0 %966
        %969 = vset.pattern.permute.xlu0 6
        %970 = vperm.xlu0 %969, %v293
        %v971 = vpop.permute.xlu0 %970
        %973 = vset.pattern.permute.xlu0 6
        %974 = vperm.xlu0 %973, %v294
        %v975 = vpop.permute.xlu0 %974
        %977 = vset.pattern.permute.xlu0 6
        %978 = vperm.xlu0 %977, %v295
        %v979 = vpop.permute.xlu0 %978
        %981 = vset.pattern.permute.xlu0 6
        %982 = vperm.xlu0 %981, %v296
        %v983 = vpop.permute.xlu0 %982
        %v985 = vlaneseq
        %v986 = vshrl.u32 %v985, 7
        %v987 = vsub.s32 6, %v986
        %v988 = vrot.slane %v297, %v987
        %v989 = vmul.f32 %v923, %v988
        %v990 = vmul.f32 %v927, %v988
        %v991 = vmul.f32 %v931, %v988
        %v992 = vmul.f32 %v935, %v988
        %v993 = vmul.f32 %v939, %v988
        %v994 = vmul.f32 %v943, %v988
        %v995 = vmul.f32 %v947, %v988
        %v996 = vmul.f32 %v951, %v988
        %v997 = vmul.f32 %v955, %v988
        %v998 = vmul.f32 %v959, %v988
        %v999 = vmul.f32 %v963, %v988
        %v1000 = vmul.f32 %v967, %v988
        %v1001 = vmul.f32 %v971, %v988
        %v1002 = vmul.f32 %v975, %v988
        %v1003 = vmul.f32 %v979, %v988
        %v1004 = vmul.f32 %v983, %v988
        %v1005 = vadd.f32 %v905, %v989
        %v1006 = vadd.f32 %v906, %v990
        %v1007 = vadd.f32 %v907, %v991
        %v1008 = vadd.f32 %v908, %v992
        %v1009 = vadd.f32 %v909, %v993
        %v1010 = vadd.f32 %v910, %v994
        %v1011 = vadd.f32 %v911, %v995
        %v1012 = vadd.f32 %v912, %v996
        %v1013 = vadd.f32 %v913, %v997
        %v1014 = vadd.f32 %v914, %v998
        %v1015 = vadd.f32 %v915, %v999
        %v1016 = vadd.f32 %v916, %v1000
        %v1017 = vadd.f32 %v917, %v1001
        %v1018 = vadd.f32 %v918, %v1002
        %v1019 = vadd.f32 %v919, %v1003
        %v1020 = vadd.f32 %v920, %v1004
        %1021 = vset.pattern.permute.xlu0 7
        %1022 = vperm.xlu0 %1021, %v281
        %v1023 = vpop.permute.xlu0 %1022
        %1025 = vset.pattern.permute.xlu0 7
        %1026 = vperm.xlu0 %1025, %v282
        %v1027 = vpop.permute.xlu0 %1026
        %1029 = vset.pattern.permute.xlu0 7
        %1030 = vperm.xlu0 %1029, %v283
        %v1031 = vpop.permute.xlu0 %1030
        %1033 = vset.pattern.permute.xlu0 7
        %1034 = vperm.xlu0 %1033, %v284
        %v1035 = vpop.permute.xlu0 %1034
        %1037 = vset.pattern.permute.xlu0 7
        %1038 = vperm.xlu0 %1037, %v285
        %v1039 = vpop.permute.xlu0 %1038
        %1041 = vset.pattern.permute.xlu0 7
        %1042 = vperm.xlu0 %1041, %v286
        %v1043 = vpop.permute.xlu0 %1042
        %1045 = vset.pattern.permute.xlu0 7
        %1046 = vperm.xlu0 %1045, %v287
        %v1047 = vpop.permute.xlu0 %1046
        %1049 = vset.pattern.permute.xlu0 7
        %1050 = vperm.xlu0 %1049, %v288
        %v1051 = vpop.permute.xlu0 %1050
        %1053 = vset.pattern.permute.xlu0 7
        %1054 = vperm.xlu0 %1053, %v289
        %v1055 = vpop.permute.xlu0 %1054
        %1057 = vset.pattern.permute.xlu0 7
        %1058 = vperm.xlu0 %1057, %v290
        %v1059 = vpop.permute.xlu0 %1058
        %1061 = vset.pattern.permute.xlu0 7
        %1062 = vperm.xlu0 %1061, %v291
        %v1063 = vpop.permute.xlu0 %1062
        %1065 = vset.pattern.permute.xlu0 7
        %1066 = vperm.xlu0 %1065, %v292
        %v1067 = vpop.permute.xlu0 %1066
        %1069 = vset.pattern.permute.xlu0 7
        %1070 = vperm.xlu0 %1069, %v293
        %v1071 = vpop.permute.xlu0 %1070
        %1073 = vset.pattern.permute.xlu0 7
        %1074 = vperm.xlu0 %1073, %v294
        %v1075 = vpop.permute.xlu0 %1074
        %1077 = vset.pattern.permute.xlu0 7
        %1078 = vperm.xlu0 %1077, %v295
        %v1079 = vpop.permute.xlu0 %1078
        %1081 = vset.pattern.permute.xlu0 7
        %1082 = vperm.xlu0 %1081, %v296
        %v1083 = vpop.permute.xlu0 %1082
        %v1085 = vlaneseq
        %v1086 = vshrl.u32 %v1085, 7
        %v1087 = vsub.s32 7, %v1086
        %v1088 = vrot.slane %v297, %v1087
        %v1089 = vmul.f32 %v1023, %v1088
        %v1090 = vmul.f32 %v1027, %v1088
        %v1091 = vmul.f32 %v1031, %v1088
        %v1092 = vmul.f32 %v1035, %v1088
        %v1093 = vmul.f32 %v1039, %v1088
        %v1094 = vmul.f32 %v1043, %v1088
        %v1095 = vmul.f32 %v1047, %v1088
        %v1096 = vmul.f32 %v1051, %v1088
        %v1097 = vmul.f32 %v1055, %v1088
        %v1098 = vmul.f32 %v1059, %v1088
        %v1099 = vmul.f32 %v1063, %v1088
        %v1100 = vmul.f32 %v1067, %v1088
        %v1101 = vmul.f32 %v1071, %v1088
        %v1102 = vmul.f32 %v1075, %v1088
        %v1103 = vmul.f32 %v1079, %v1088
        %v1104 = vmul.f32 %v1083, %v1088
        %v1105 = vadd.f32 %v1005, %v1089
        %v1106 = vadd.f32 %v1006, %v1090
        %v1107 = vadd.f32 %v1007, %v1091
        %v1108 = vadd.f32 %v1008, %v1092
        %v1109 = vadd.f32 %v1009, %v1093
        %v1110 = vadd.f32 %v1010, %v1094
        %v1111 = vadd.f32 %v1011, %v1095
        %v1112 = vadd.f32 %v1012, %v1096
        %v1113 = vadd.f32 %v1013, %v1097
        %v1114 = vadd.f32 %v1014, %v1098
        %v1115 = vadd.f32 %v1015, %v1099
        %v1116 = vadd.f32 %v1016, %v1100
        %v1117 = vadd.f32 %v1017, %v1101
        %v1118 = vadd.f32 %v1018, %v1102
        %v1119 = vadd.f32 %v1019, %v1103
        %v1120 = vadd.f32 %v1020, %v1104
        %v1121 = vmax.f32 %v1105, 0.0
        %v1122 = vmax.f32 %v1106, 0.0
        %v1123 = vmax.f32 %v1107, 0.0
        %v1124 = vmax.f32 %v1108, 0.0
        %v1125 = vmax.f32 %v1109, 0.0
        %v1126 = vmax.f32 %v1110, 0.0
        %v1127 = vmax.f32 %v1111, 0.0
        %v1128 = vmax.f32 %v1112, 0.0
        %v1129 = vmax.f32 %v1113, 0.0
        %v1130 = vmax.f32 %v1114, 0.0
        %v1131 = vmax.f32 %v1115, 0.0
        %v1132 = vmax.f32 %v1116, 0.0
        %v1133 = vmax.f32 %v1117, 0.0
        %v1134 = vmax.f32 %v1118, 0.0
        %v1135 = vmax.f32 %v1119, 0.0
        %v1136 = vmax.f32 %v1120, 0.0
        %v1137 = vpack.c.bf16 %v1122, %v1121
        %v1138 = vpack.c.bf16 %v1124, %v1123
        %v1139 = vpack.c.bf16 %v1126, %v1125
        %v1140 = vpack.c.bf16 %v1128, %v1127
        %v1141 = vpack.c.bf16 %v1130, %v1129
        %v1142 = vpack.c.bf16 %v1132, %v1131
        %v1143 = vpack.c.bf16 %v1134, %v1133
        %v1144 = vpack.c.bf16 %v1136, %v1135
        %v1145 = vld [vmem:[%s3] sm:$0xf]
        %v1146 = vld [vmem:[%s3 + $0x4] sm:$0xf]
        %v1147 = vld [vmem:[%s3 + $0x8] sm:$0xf]
        %v1148 = vld [vmem:[%s3 + $0xc] sm:$0xf]
        %v1149 = vld [vmem:[%s3 + $0x10] sm:$0xf]
        %v1150 = vld [vmem:[%s3 + $0x14] sm:$0xf]
        %v1151 = vld [vmem:[%s3 + $0x18] sm:$0xf]
        %v1152 = vld [vmem:[%s3 + $0x1c] sm:$0xf]
        %v1153 = vld [vmem:[%s3 + $0x20] sm:$0xf]
        %v1154 = vld [vmem:[%s3 + $0x24] sm:$0xf]
        %v1155 = vld [vmem:[%s3 + $0x28] sm:$0xf]
        %v1156 = vld [vmem:[%s3 + $0x2c] sm:$0xf]
        %v1157 = vld [vmem:[%s3 + $0x30] sm:$0xf]
        %v1158 = vld [vmem:[%s3 + $0x34] sm:$0xf]
        %v1159 = vld [vmem:[%s3 + $0x38] sm:$0xf]
        %v1160 = vld [vmem:[%s3 + $0x3c] sm:$0xf]
        %v1161 = vld [vmem:[%s4] sm:$0x1]
        %v1163 = vlaneseq
        %v1164 = vshrl.u32 %v1163, 7
        %v1165 = vsub.s32 0, %v1164
        %v1166 = vrot.slane %v1161, %v1165
        %v1184 = vunpack.c.l.b16 %v1145
        %v1185 = vunpack.c.l.b16 %v1146
        %v1186 = vunpack.c.l.b16 %v1147
        %v1187 = vunpack.c.l.b16 %v1148
        %v1188 = vunpack.c.l.b16 %v1149
        %v1189 = vunpack.c.l.b16 %v1150
        %v1190 = vunpack.c.l.b16 %v1151
        %v1191 = vunpack.c.l.b16 %v1152
        %v1192 = vunpack.c.l.b16 %v1153
        %v1193 = vunpack.c.l.b16 %v1154
        %v1194 = vunpack.c.l.b16 %v1155
        %v1195 = vunpack.c.l.b16 %v1156
        %v1196 = vunpack.c.l.b16 %v1157
        %v1197 = vunpack.c.l.b16 %v1158
        %v1198 = vunpack.c.l.b16 %v1159
        %v1199 = vunpack.c.l.b16 %v1160
        %v1200 = vpack.c.b16 %v1185, %v1184
        %v1201 = vpack.c.b16 %v1187, %v1186
        %v1202 = vpack.c.b16 %v1189, %v1188
        %v1203 = vpack.c.b16 %v1191, %v1190
        %v1204 = vpack.c.b16 %v1193, %v1192
        %v1205 = vpack.c.b16 %v1195, %v1194
        %v1206 = vpack.c.b16 %v1197, %v1196
        %v1207 = vpack.c.b16 %v1199, %v1198
        %1216 = vmatprep.subr.bf16.mxu0 0
        %1217 = vmatpush1.bf16.msra.mxu0 %v1200
        %1218 = vmatprep.subr.bf16.mxu0 0
        %1219 = vmatpush1.bf16.msra.mxu0 %v1201
        %1220 = vmatprep.subr.bf16.mxu0 0
        %1221 = vmatpush1.bf16.msra.mxu0 %v1202
        %1222 = vmatprep.subr.bf16.mxu0 0
        %1223 = vmatpush1.bf16.msra.mxu0 %v1203
        %1224 = vmatprep.subr.bf16.mxu0 0
        %1225 = vmatpush1.bf16.msra.mxu0 %v1204
        %1226 = vmatprep.subr.bf16.mxu0 0
        %1227 = vmatpush1.bf16.msra.mxu0 %v1205
        %1228 = vmatprep.subr.bf16.mxu0 0
        %1229 = vmatpush1.bf16.msra.mxu0 %v1206
        %1230 = vmatprep.subr.bf16.mxu0 0
        %1231 = vmatpush1.bf16.msra.mxu0 %v1207
        %1232 = vmatprep.subr.bf16.mxu0 0
        %1233 = vmatpush1.bf16.msra.mxu0 0
        %1234 = vmatprep.subr.bf16.mxu0 0
        %1235 = vmatpush1.bf16.msra.mxu0 0
        %1236 = vmatprep.subr.bf16.mxu0 0
        %1237 = vmatpush1.bf16.msra.mxu0 0
        %1238 = vmatprep.subr.bf16.mxu0 0
        %1239 = vmatpush1.bf16.msra.mxu0 0
        %1240 = vmatprep.subr.bf16.mxu0 0
        %1241 = vmatpush1.bf16.msra.mxu0 0
        %1242 = vmatprep.subr.bf16.mxu0 0
        %1243 = vmatpush1.bf16.msra.mxu0 0
        %1244 = vmatprep.subr.bf16.mxu0 0
        %1245 = vmatpush1.bf16.msra.mxu0 0
        %1246 = vmatprep.subr.bf16.mxu0 0
        %1247 = vmatpush1.bf16.msra.mxu0 0
        %1248 = vmatprep.mubr.bf16.mxu0 0
        %1249 = vmatmul.mubr.bf16.gmra.mrb[0].mxu0 %v1137
        %v1250 = vpop.f32.mrb[0].mxu0
        %v1251 = vadd.f32 %v1166, %v1250
        %v1252 = vpop.f32.mrb[0].mxu0
        %v1253 = vpop.f32.mrb[0].mxu0
        %v1254 = vadd.f32 %v1166, %v1253
        %v1255 = vpop.f32.mrb[0].mxu0
        %1256 = vmatprep.mubr.bf16.mxu0 0
        %1257 = vmatmul.mubr.bf16.gmra.mrb[0].mxu0 %v1138
        %v1258 = vpop.f32.mrb[0].mxu0
        %v1259 = vadd.f32 %v1166, %v1258
        %v1260 = vpop.f32.mrb[0].mxu0
        %v1261 = vpop.f32.mrb[0].mxu0
        %v1262 = vadd.f32 %v1166, %v1261
        %v1263 = vpop.f32.mrb[0].mxu0
        %1264 = vmatprep.mubr.bf16.mxu0 0
        %1265 = vmatmul.mubr.bf16.gmra.mrb[0].mxu0 %v1139
        %v1266 = vpop.f32.mrb[0].mxu0
        %v1267 = vadd.f32 %v1166, %v1266
        %v1268 = vpop.f32.mrb[0].mxu0
        %v1269 = vpop.f32.mrb[0].mxu0
        %v1270 = vadd.f32 %v1166, %v1269
        %v1271 = vpop.f32.mrb[0].mxu0
        %1272 = vmatprep.mubr.bf16.mxu0 0
        %1273 = vmatmul.mubr.bf16.gmra.mrb[0].mxu0 %v1140
        %v1274 = vpop.f32.mrb[0].mxu0
        %v1275 = vadd.f32 %v1166, %v1274
        %v1276 = vpop.f32.mrb[0].mxu0
        %v1277 = vpop.f32.mrb[0].mxu0
        %v1278 = vadd.f32 %v1166, %v1277
        %v1279 = vpop.f32.mrb[0].mxu0
        %1280 = vmatprep.mubr.bf16.mxu0 0
        %1281 = vmatmul.mubr.bf16.gmra.mrb[0].mxu0 %v1141
        %v1282 = vpop.f32.mrb[0].mxu0
        %v1283 = vadd.f32 %v1166, %v1282
        %v1284 = vpop.f32.mrb[0].mxu0
        %v1285 = vpop.f32.mrb[0].mxu0
        %v1286 = vadd.f32 %v1166, %v1285
        %v1287 = vpop.f32.mrb[0].mxu0
        %1288 = vmatprep.mubr.bf16.mxu0 0
        %1289 = vmatmul.mubr.bf16.gmra.mrb[0].mxu0 %v1142
        %v1290 = vpop.f32.mrb[0].mxu0
        %v1291 = vadd.f32 %v1166, %v1290
        %v1292 = vpop.f32.mrb[0].mxu0
        %v1293 = vpop.f32.mrb[0].mxu0
        %v1294 = vadd.f32 %v1166, %v1293
        %v1295 = vpop.f32.mrb[0].mxu0
        %1296 = vmatprep.mubr.bf16.mxu0 0
        %1297 = vmatmul.mubr.bf16.gmra.mrb[0].mxu0 %v1143
        %v1298 = vpop.f32.mrb[0].mxu0
        %v1299 = vadd.f32 %v1166, %v1298
        %v1300 = vpop.f32.mrb[0].mxu0
        %v1301 = vpop.f32.mrb[0].mxu0
        %v1302 = vadd.f32 %v1166, %v1301
        %v1303 = vpop.f32.mrb[0].mxu0
        %1304 = vmatprep.mubr.bf16.mxu0 0
        %1305 = vmatmul.mubr.bf16.gmra.mrb[0].mxu0 %v1144
        %v1306 = vpop.f32.mrb[0].mxu0
        %v1307 = vadd.f32 %v1166, %v1306
        %v1308 = vpop.f32.mrb[0].mxu0
        %v1309 = vpop.f32.mrb[0].mxu0
        %v1310 = vadd.f32 %v1166, %v1309
        %v1311 = vpop.f32.mrb[0].mxu0
        %1312 = vdwg.mxu0
        %v1313 = vmax.f32 %v1251, 0.0
        %v1314 = vmax.f32 %v1254, 0.0
        %v1315 = vmax.f32 %v1259, 0.0
        %v1316 = vmax.f32 %v1262, 0.0
        %v1317 = vmax.f32 %v1267, 0.0
        %v1318 = vmax.f32 %v1270, 0.0
        %v1319 = vmax.f32 %v1275, 0.0
        %v1320 = vmax.f32 %v1278, 0.0
        %v1321 = vmax.f32 %v1283, 0.0
        %v1322 = vmax.f32 %v1286, 0.0
        %v1323 = vmax.f32 %v1291, 0.0
        %v1324 = vmax.f32 %v1294, 0.0
        %v1325 = vmax.f32 %v1299, 0.0
        %v1326 = vmax.f32 %v1302, 0.0
        %v1327 = vmax.f32 %v1307, 0.0
        %v1328 = vmax.f32 %v1310, 0.0
        %v1329 = vpack.c.bf16 %v1314, %v1313
        %v1330 = vpack.c.bf16 %v1316, %v1315
        %v1331 = vpack.c.bf16 %v1318, %v1317
        %v1332 = vpack.c.bf16 %v1320, %v1319
        %v1333 = vpack.c.bf16 %v1322, %v1321
        %v1334 = vpack.c.bf16 %v1324, %v1323
        %v1335 = vpack.c.bf16 %v1326, %v1325
        %v1336 = vpack.c.bf16 %v1328, %v1327
        %v1337 = vld [vmem:[%s5] sm:$0xf]
        %v1338 = vld [vmem:[%s5 + $0x4] sm:$0xf]
        %v1339 = vld [vmem:[%s5 + $0x8] sm:$0xf]
        %v1340 = vld [vmem:[%s5 + $0xc] sm:$0xf]
        %v1341 = vld [vmem:[%s5 + $0x10] sm:$0xf]
        %v1342 = vld [vmem:[%s5 + $0x14] sm:$0xf]
        %v1343 = vld [vmem:[%s5 + $0x18] sm:$0xf]
        %v1344 = vld [vmem:[%s5 + $0x1c] sm:$0xf]
        %v1345 = vld [vmem:[%s5 + $0x20] sm:$0xf]
        %v1346 = vld [vmem:[%s5 + $0x24] sm:$0xf]
        %v1347 = vld [vmem:[%s5 + $0x28] sm:$0xf]
        %v1348 = vld [vmem:[%s5 + $0x2c] sm:$0xf]
        %v1349 = vld [vmem:[%s5 + $0x30] sm:$0xf]
        %v1350 = vld [vmem:[%s5 + $0x34] sm:$0xf]
        %v1351 = vld [vmem:[%s5 + $0x38] sm:$0xf]
        %v1352 = vld [vmem:[%s5 + $0x3c] sm:$0xf]
        %v1353 = vld [vmem:[%s6] sm:$0x1]
        %v1355 = vlaneseq
        %v1356 = vshrl.u32 %v1355, 7
        %v1357 = vsub.s32 0, %v1356
        %v1358 = vrot.slane %v1353, %v1357
        %v1376 = vunpack.c.l.b16 %v1337
        %v1377 = vunpack.c.l.b16 %v1338
        %v1378 = vunpack.c.l.b16 %v1339
        %v1379 = vunpack.c.l.b16 %v1340
        %v1380 = vunpack.c.l.b16 %v1341
        %v1381 = vunpack.c.l.b16 %v1342
        %v1382 = vunpack.c.l.b16 %v1343
        %v1383 = vunpack.c.l.b16 %v1344
        %v1384 = vunpack.c.l.b16 %v1345
        %v1385 = vunpack.c.l.b16 %v1346
        %v1386 = vunpack.c.l.b16 %v1347
        %v1387 = vunpack.c.l.b16 %v1348
        %v1388 = vunpack.c.l.b16 %v1349
        %v1389 = vunpack.c.l.b16 %v1350
        %v1390 = vunpack.c.l.b16 %v1351
        %v1391 = vunpack.c.l.b16 %v1352
        %v1392 = vpack.c.b16 %v1377, %v1376
        %v1393 = vpack.c.b16 %v1379, %v1378
        %v1394 = vpack.c.b16 %v1381, %v1380
        %v1395 = vpack.c.b16 %v1383, %v1382
        %v1396 = vpack.c.b16 %v1385, %v1384
        %v1397 = vpack.c.b16 %v1387, %v1386
        %v1398 = vpack.c.b16 %v1389, %v1388
        %v1399 = vpack.c.b16 %v1391, %v1390
        %1408 = vmatprep.subr.bf16.mxu0 0
        %1409 = vmatpush1.bf16.msra.mxu0 %v1392
        %1410 = vmatprep.subr.bf16.mxu0 0
        %1411 = vmatpush1.bf16.msra.mxu0 %v1393
        %1412 = vmatprep.subr.bf16.mxu0 0
        %1413 = vmatpush1.bf16.msra.mxu0 %v1394
        %1414 = vmatprep.subr.bf16.mxu0 0
        %1415 = vmatpush1.bf16.msra.mxu0 %v1395
        %1416 = vmatprep.subr.bf16.mxu0 0
        %1417 = vmatpush1.bf16.msra.mxu0 %v1396
        %1418 = vmatprep.subr.bf16.mxu0 0
        %1419 = vmatpush1.bf16.msra.mxu0 %v1397
        %1420 = vmatprep.subr.bf16.mxu0 0
        %1421 = vmatpush1.bf16.msra.mxu0 %v1398
        %1422 = vmatprep.subr.bf16.mxu0 0
        %1423 = vmatpush1.bf16.msra.mxu0 %v1399
        %1424 = vmatprep.subr.bf16.mxu0 0
        %1425 = vmatpush1.bf16.msra.mxu0 0
        %1426 = vmatprep.subr.bf16.mxu0 0
        %1427 = vmatpush1.bf16.msra.mxu0 0
        %1428 = vmatprep.subr.bf16.mxu0 0
        %1429 = vmatpush1.bf16.msra.mxu0 0
        %1430 = vmatprep.subr.bf16.mxu0 0
        %1431 = vmatpush1.bf16.msra.mxu0 0
        %1432 = vmatprep.subr.bf16.mxu0 0
        %1433 = vmatpush1.bf16.msra.mxu0 0
        %1434 = vmatprep.subr.bf16.mxu0 0
        %1435 = vmatpush1.bf16.msra.mxu0 0
        %1436 = vmatprep.subr.bf16.mxu0 0
        %1437 = vmatpush1.bf16.msra.mxu0 0
        %1438 = vmatprep.subr.bf16.mxu0 0
        %1439 = vmatpush1.bf16.msra.mxu0 0
        %1440 = vmatprep.mubr.bf16.mxu0 0
        %1441 = vmatmul.mubr.bf16.gmra.mrb[0].mxu0 %v1329
        %v1442 = vpop.f32.mrb[0].mxu0
        %v1443 = vadd.f32 %v1358, %v1442
        %v1444 = vpop.f32.mrb[0].mxu0
        %v1445 = vpop.f32.mrb[0].mxu0
        %v1446 = vadd.f32 %v1358, %v1445
        %v1447 = vpop.f32.mrb[0].mxu0
        %1448 = vmatprep.mubr.bf16.mxu0 0
        %1449 = vmatmul.mubr.bf16.gmra.mrb[0].mxu0 %v1330
        %v1450 = vpop.f32.mrb[0].mxu0
        %v1451 = vadd.f32 %v1358, %v1450
        %v1452 = vpop.f32.mrb[0].mxu0
        %v1453 = vpop.f32.mrb[0].mxu0
        %v1454 = vadd.f32 %v1358, %v1453
        %v1455 = vpop.f32.mrb[0].mxu0
        %1456 = vmatprep.mubr.bf16.mxu0 0
        %1457 = vmatmul.mubr.bf16.gmra.mrb[0].mxu0 %v1331
        %v1458 = vpop.f32.mrb[0].mxu0
        %v1459 = vadd.f32 %v1358, %v1458
        %v1460 = vpop.f32.mrb[0].mxu0
        %v1461 = vpop.f32.mrb[0].mxu0
        %v1462 = vadd.f32 %v1358, %v1461
        %v1463 = vpop.f32.mrb[0].mxu0
        %1464 = vmatprep.mubr.bf16.mxu0 0
        %1465 = vmatmul.mubr.bf16.gmra.mrb[0].mxu0 %v1332
        %v1466 = vpop.f32.mrb[0].mxu0
        %v1467 = vadd.f32 %v1358, %v1466
        %v1468 = vpop.f32.mrb[0].mxu0
        %v1469 = vpop.f32.mrb[0].mxu0
        %v1470 = vadd.f32 %v1358, %v1469
        %v1471 = vpop.f32.mrb[0].mxu0
        %1472 = vmatprep.mubr.bf16.mxu0 0
        %1473 = vmatmul.mubr.bf16.gmra.mrb[0].mxu0 %v1333
        %v1474 = vpop.f32.mrb[0].mxu0
        %v1475 = vadd.f32 %v1358, %v1474
        %v1476 = vpop.f32.mrb[0].mxu0
        %v1477 = vpop.f32.mrb[0].mxu0
        %v1478 = vadd.f32 %v1358, %v1477
        %v1479 = vpop.f32.mrb[0].mxu0
        %1480 = vmatprep.mubr.bf16.mxu0 0
        %1481 = vmatmul.mubr.bf16.gmra.mrb[0].mxu0 %v1334
        %v1482 = vpop.f32.mrb[0].mxu0
        %v1483 = vadd.f32 %v1358, %v1482
        %v1484 = vpop.f32.mrb[0].mxu0
        %v1485 = vpop.f32.mrb[0].mxu0
        %v1486 = vadd.f32 %v1358, %v1485
        %v1487 = vpop.f32.mrb[0].mxu0
        %1488 = vmatprep.mubr.bf16.mxu0 0
        %1489 = vmatmul.mubr.bf16.gmra.mrb[0].mxu0 %v1335
        %v1490 = vpop.f32.mrb[0].mxu0
        %v1491 = vadd.f32 %v1358, %v1490
        %v1492 = vpop.f32.mrb[0].mxu0
        %v1493 = vpop.f32.mrb[0].mxu0
        %v1494 = vadd.f32 %v1358, %v1493
        %v1495 = vpop.f32.mrb[0].mxu0
        %1496 = vmatprep.mubr.bf16.mxu0 0
        %1497 = vmatmul.mubr.bf16.gmra.mrb[0].mxu0 %v1336
        %v1498 = vpop.f32.mrb[0].mxu0
        %v1499 = vadd.f32 %v1358, %v1498
        %v1500 = vpop.f32.mrb[0].mxu0
        %v1501 = vpop.f32.mrb[0].mxu0
        %v1502 = vadd.f32 %v1358, %v1501
        %v1503 = vpop.f32.mrb[0].mxu0
        %1504 = vdwg.mxu0
        %1505 = vst [vmem:[%s272] sm:$0xff] %v1443
        %1506 = vst [vmem:[%s272 + $0x8] sm:$0xff] %v1446
        %1507 = vst [vmem:[%s272 + $0x10] sm:$0xff] %v1451
        %1508 = vst [vmem:[%s272 + $0x18] sm:$0xff] %v1454
        %1509 = vst [vmem:[%s272 + $0x20] sm:$0xff] %v1459
        %1510 = vst [vmem:[%s272 + $0x28] sm:$0xff] %v1462
        %1511 = vst [vmem:[%s272 + $0x30] sm:$0xff] %v1467
        %1512 = vst [vmem:[%s272 + $0x38] sm:$0xff] %v1470
        %1513 = vst [vmem:[%s272 + $0x40] sm:$0xff] %v1475
        %1514 = vst [vmem:[%s272 + $0x48] sm:$0xff] %v1478
        %1515 = vst [vmem:[%s272 + $0x50] sm:$0xff] %v1483
        %1516 = vst [vmem:[%s272 + $0x58] sm:$0xff] %v1486
        %1517 = vst [vmem:[%s272 + $0x60] sm:$0xff] %v1491
        %1518 = vst [vmem:[%s272 + $0x68] sm:$0xff] %v1494
        %1519 = vst [vmem:[%s272 + $0x70] sm:$0xff] %v1499
        %1520 = vst [vmem:[%s272 + $0x78] sm:$0xff] %v1502
        %s1521 = sand.u32 %s181, 1
        %s1522 = scalar_lea.sflag [#allocation3], %s1521
        %s1523 = sand.u32 %s181, 1
        %s1524 = smul.addr %s1523, 128
        %s1525 = scalar_lea.vmem [#allocation2], %s1524
        // Predicated region
        $region49: #{tpu_custom_call.1} parent=47 // pred_check
          %p1526 = pneg %p191
        $region50: #{tpu_custom_call.1} parent=47 // pred_check_branch
          %1528 = sbr.rel (%p1526) target = $region52
        $region51: #{tpu_custom_call.1} parent=47 // pred_region
          %s1529 = smul.u32 16, %s21
          %s1531 = ssub.s32 2048, 2048
          %1532 = vsyncadd %s1522, %s1531
          %s1533 = smul.addr %s1529, 128
          %s1534 = scalar_lea.hbm %s7, %s1533
          %s1535 = sshll.u32 %s1525, 4
          %s1536 = int_to_ptr.vmem [resolvable:$true] %s1535
          %1541 = dma.vmem_to_hbm [thread:$0]  %s1536, 2048, %s1534, %s1522, 128, 128, 8
        $region52: #{tpu_custom_call.1} parent=47 // pred_fallthru
          _
      $region48: #{tpu_custom_call.1} parent=5 // pred_fallthru
        _
      %p1542 = scmp.le.s32.totalorder 2, %s16
      // Predicated region
      $region53: #{tpu_custom_call.1} parent=5 // pred_check
        %p1543 = pneg %p1542
      $region54: #{tpu_custom_call.1} parent=5 // pred_check_branch
        %1545 = sbr.rel (%p1543) target = $region56
      $region55: #{tpu_custom_call.1} parent=5 // pred_region
        %s1546 = ssub.s32 %s16, 2
        // Predicated region
        $region57: #{tpu_custom_call.1} parent=55 // pred_check
          %p1547 = pneg %p197
        $region58: #{tpu_custom_call.1} parent=55 // pred_check_branch
          %1549 = sbr.rel (%p1547) target = $region60
        $region59: #{tpu_custom_call.1} parent=55 // pred_region
          %s1550 = sand.u32 %s182, 1
          %s1551 = scalar_lea.sflag [#allocation3], %s1550
          %s1552 = sand.u32 %s182, 1
          %s1553 = smul.addr %s1552, 128
          %s1554 = scalar_lea.vmem [#allocation2], %s1553
          %1555 = dma.done %s1551, 2048
        $region60: #{tpu_custom_call.1} parent=55 // pred_fallthru
          _
      $region56: #{tpu_custom_call.1} parent=5 // pred_fallthru
        _
    $region6: #{tpu_custom_call.1} parent=1 // loop_footer
      %s20 = sadd.s32 1, %s16
    $region7: #{tpu_custom_call.1} parent=1 // loop_footer_branch
      %15 = sbr.rel target = $region3
    $region8: #{tpu_custom_call.1} parent=1 // loop_exit
      _
    %1556 = vsyncpa [#allocation3], 1
    %s1557 = scalar_lea.sflag [#allocation3], 1
    %1558 = vsyncpa %s1557, 1

</llo_original>
